<compile_context>
chip_gen: v7x
topology: tpu7x:2x2x1
jax: 0.10.0
libtpu: 0.0.40
codegen_flags: <defaults>
</compile_context>

<pallas_src>
import functools
import math

import jax
import jax.numpy as jnp
from jax.experimental import pallas as pl
from jax.experimental.pallas import tpu as pltpu


# ----------------------------- constants / helpers -----------------------------

_VMEM_LINEAR = 48 * 1024 * 1024   # weight-resident linears need ~20 MB at BERT-base
_VMEM_ATTN = 32 * 1024 * 1024     # per-head-group attention fits well under this


def _row_plan(n, tm):
    """Row tiling plan: a single full-extent tile for small n, otherwise fixed
    tm-row tiles with the row count padded up to a multiple of tm.  Never silently
    falls back to a huge full-dim block."""
    if n <= tm:
        return n, n
    assert tm % 8 == 0, "row tile must be sublane aligned"
    return tm, pl.cdiv(n, tm) * tm


def _pad_rows(x, n_pad):
    n = x.shape[0]
    if n_pad == n:
        return x
    return jnp.pad(x, ((0, n_pad - n), (0, 0)))


def _heads_per_group(nH, dH):
    """Largest divisor of nH such that (heads_per_group * dH) <= 128 lanes
    (=> 128-lane-wide output stores at BERT-base: 2 heads * 64 = 128)."""
    if dH >= 128:
        return 1
    g = min(nH, max(1, 128 // dH))
    while nH % g:
        g -= 1
    return g


# ----------------------------- Pallas kernels -----------------------------

def _linear_kernel(x_ref, w_ref, b_ref, o_ref, *, activation):
    """One (tm, N) output row-slab of y = act(x @ W + b); W is VMEM-resident."""
    y = jnp.dot(x_ref[...], w_ref[...], preferred_element_type=jnp.float32)
    y = y + b_ref[...].astype(jnp.float32)
    if activation == "gelu":
        # TODO(synk): HF BERT uses exact erf-GELU; tanh-approx GELU used for Mosaic support.
        y = jax.nn.gelu(y, approximate=True)
    elif activation == "tanh":
        y = jnp.tanh(y)
    o_ref[...] = y.astype(o_ref.dtype)


def _linear_add_ln_kernel(x_ref, w_ref, b_ref, res_ref, g_ref, beta_ref, o_ref, *, eps):
    """Fused: LayerNorm((x @ W + b) + residual). W is VMEM-resident; output spans
    the full hidden dim so the LayerNorm reduction is local."""
    y = jnp.dot(x_ref[...], w_ref[...], preferred_element_type=jnp.float32)
    y = y + b_ref[...].astype(jnp.float32) + res_ref[...].astype(jnp.float32)
    mean = jnp.mean(y, axis=-1, keepdims=True)
    var = jnp.mean(jnp.square(y - mean), axis=-1, keepdims=True)
    out = (y - mean) * jax.lax.rsqrt(var + eps) * g_ref[...] + beta_ref[...]
    o_ref[...] = out.astype(o_ref.dtype)


def _layernorm_kernel(x_ref, g_ref, b_ref, o_ref, *, eps):
    """Plain LayerNorm over the last (hidden) axis, eps=1e-12 like BERT."""
    x = x_ref[...].astype(jnp.float32)
    mean = jnp.mean(x, axis=-1, keepdims=True)
    var = jnp.mean(jnp.square(x - mean), axis=-1, keepdims=True)
    y = (x - mean) * jax.lax.rsqrt(var + eps) * g_ref[...] + b_ref[...]
    o_ref[...] = y.astype(o_ref.dtype)


def _attention_kernel(qkv_ref, m_ref, o_ref, *, gH, dH, scale):
    """Attention for one (batch, head-group) grid step.

    qkv_ref block is (1, S, 3*gW) laid out as [q_group | k_group | v_group]
    (the fused QKV weight columns were pre-grouped), so all column slices are
    static.  The small static per-head loop keeps live f32 intermediates at
    ~(S, S) per head; the group's context heads are merged and written with a
    single full-lane-width store."""
    gW = gH * dH
    blk = qkv_ref[0]                                  # (S, 3*gW) bf16
    bias = m_ref[0].astype(jnp.float32)               # (1, S) additive key mask

    ctxs = []
    for hh in range(gH):                              # gH is tiny (<= 2 at BERT-base)
        q = blk[:, hh * dH:(hh + 1) * dH]             # (S, dH)
        k = blk[:, gW + hh * dH: gW + (hh + 1) * dH]
        v = blk[:, 2 * gW + hh * dH: 2 * gW + (hh + 1) * dH]
        s = jnp.dot(q, k.T, preferred_element_type=jnp.float32) * scale + bias
        s = s - jnp.max(s, axis=-1, keepdims=True)
        p = jnp.exp(s)
        p = p * pl.reciprocal(jnp.sum(p, axis=-1, keepdims=True), approx=True)
        ctx = jnp.dot(p.astype(v.dtype), v, preferred_element_type=jnp.float32)
        ctxs.append(ctx.astype(o_ref.dtype))          # (S, dH)

    o_ref[0] = ctxs[0] if gH == 1 else jnp.concatenate(ctxs, axis=-1)


def _pooler_cls_kernel(cls_ref, pw_ref, pb_ref, fw_ref, fb_ref, o_ref):
    """Fused BERT pooler (tanh(W_p @ CLS + b_p)) + 2-way classifier head.
    Pooled vector kept in f32 through the classifier matmul."""
    pooled = jnp.tanh(jnp.dot(cls_ref[...], pw_ref[...],
                              preferred_element_type=jnp.float32) + pb_ref[...])
    logits = jnp.dot(pooled, fw_ref[...].astype(jnp.float32),
                     preferred_element_type=jnp.float32) + fb_ref[...]
    o_ref[...] = logits.astype(o_ref.dtype)


# ----------------------------- kernel wrappers -----------------------------

def linear(x, w, b, activation=None, out_dtype=jnp.bfloat16, tm=512):
    """y = act(x @ w + b) with the weight VMEM-resident; grid only over row tiles."""
    n, kdim = x.shape
    m = w.shape[1]
    tile, n_pad = _row_plan(n, tm)
    xp = _pad_rows(x, n_pad)

    ce = pl.CostEstimate(
        flops=int(2 * n_pad * kdim * m),
        transcendentals=int(n_pad * m) if activation in ("gelu", "tanh") else 0,
        bytes_accessed=int((n_pad * kdim + kdim * m + n_pad * m) * 2 + m * 4))

    y = pl.pallas_call(
        functools.partial(_linear_kernel, activation=activation),
        out_shape=jax.ShapeDtypeStruct((n_pad, m), out_dtype),
        grid=(pl.cdiv(n_pad, tile),),
        in_specs=[pl.BlockSpec((tile, kdim), lambda i: (i, 0)),
                  pl.BlockSpec((kdim, m), lambda i: (0, 0)),     # resident weight
                  pl.BlockSpec((1, m), lambda i: (0, 0))],        # resident bias
        out_specs=pl.BlockSpec((tile, m), lambda i: (i, 0)),
        compiler_params=pltpu.CompilerParams(
            dimension_semantics=("parallel",),
            vmem_limit_bytes=_VMEM_LINEAR),
        cost_estimate=ce,
    )(xp, w, b)
    return y if n_pad == n else y[:n]


def linear_add_layernorm(x, w, b, residual, gamma, beta, eps=1e-12, tm=512):
    """y = LayerNorm(x @ w + b + residual); weight VMEM-resident, grid over rows."""
    n, kdim = x.shape
    hdim = w.shape[1]
    tile, n_pad = _row_plan(n, tm)
    xp = _pad_rows(x, n_pad)
    rp = _pad_rows(residual, n_pad)

    ce = pl.CostEstimate(
        flops=int(2 * n_pad * kdim * hdim + 10 * n_pad * hdim),
        transcendentals=int(n_pad),
        bytes_accessed=int((n_pad * kdim + kdim * hdim + 2 * n_pad * hdim) * 2
                           + 3 * hdim * 4))

    y = pl.pallas_call(
        functools.partial(_linear_add_ln_kernel, eps=eps),
        out_shape=jax.ShapeDtypeStruct((n_pad, hdim), jnp.bfloat16),
        grid=(pl.cdiv(n_pad, tile),),
        in_specs=[pl.BlockSpec((tile, kdim), lambda i: (i, 0)),
                  pl.BlockSpec((kdim, hdim), lambda i: (0, 0)),   # resident weight
                  pl.BlockSpec((1, hdim), lambda i: (0, 0)),
                  pl.BlockSpec((tile, hdim), lambda i: (i, 0)),   # residual
                  pl.BlockSpec((1, hdim), lambda i: (0, 0)),
                  pl.BlockSpec((1, hdim), lambda i: (0, 0))],
        out_specs=pl.BlockSpec((tile, hdim), lambda i: (i, 0)),
        compiler_params=pltpu.CompilerParams(
            dimension_semantics=("parallel",),
            vmem_limit_bytes=_VMEM_LINEAR),
        cost_estimate=ce,
    )(xp, w, b, rp, gamma, beta)
    return y if n_pad == n else y[:n]


def layernorm(x, gamma, beta, eps=1e-12, tm=512):
    n, h = x.shape
    tile, n_pad = _row_plan(n, tm)
    xp = _pad_rows(x, n_pad)
    y = pl.pallas_call(
        functools.partial(_layernorm_kernel, eps=eps),
        out_shape=jax.ShapeDtypeStruct((n_pad, h), jnp.bfloat16),
        grid=(pl.cdiv(n_pad, tile),),
        in_specs=[pl.BlockSpec((tile, h), lambda i: (i, 0)),
                  pl.BlockSpec((1, h), lambda i: (0, 0)),
                  pl.BlockSpec((1, h), lambda i: (0, 0))],
        out_specs=pl.BlockSpec((tile, h), lambda i: (i, 0)),
        compiler_params=pltpu.CompilerParams(dimension_semantics=("parallel",)),
    )(xp, gamma, beta)
    return y if n_pad == n else y[:n]


def attention(qkv_grouped, mask_bias, nH, dH):
    """qkv_grouped: (B, S, 3H) bf16 with columns grouped per head-group as
    [q_g | k_g | v_g]; mask_bias: (B, 1, S) f32 additive key mask.  -> (B, S, H)
    with standard head-major column order."""
    B, S, threeH = qkv_grouped.shape
    H = nH * dH
    gH = _heads_per_group(nH, dH)
    nG = nH // gH
    gW = gH * dH
    scale = 1.0 / math.sqrt(dH)

    ce = pl.CostEstimate(
        flops=int(4 * B * S * S * H),
        transcendentals=int(B * nH * S * S),
        bytes_accessed=int(B * S * 3 * H * 2 + B * S * 4 + B * S * H * 2))

    # TODO(synk): at very long sequences, additionally tile queries (flash-style)
    # inside each head-group; at S=512 the per-head (S,S) f32 score fits easily.
    return pl.pallas_call(
        functools.partial(_attention_kernel, gH=gH, dH=dH, scale=scale),
        out_shape=jax.ShapeDtypeStruct((B, S, H), jnp.bfloat16),
        grid=(B, nG),
        in_specs=[pl.BlockSpec((1, S, 3 * gW), lambda b, g: (b, 0, g)),
                  pl.BlockSpec((1, 1, S), lambda b, g: (b, 0, 0))],
        out_specs=pl.BlockSpec((1, S, gW), lambda b, g: (b, 0, g)),
        compiler_params=pltpu.CompilerParams(
            dimension_semantics=("parallel", "parallel"),
            vmem_limit_bytes=_VMEM_ATTN),
        cost_estimate=ce,
    )(qkv_grouped, mask_bias)


def pooler_classifier(cls, pw, pb, fw, fb):
    B = cls.shape[0]
    n_labels = fw.shape[1]
    return pl.pallas_call(
        _pooler_cls_kernel,
        out_shape=jax.ShapeDtypeStruct((B, n_labels), jnp.float32),
    )(cls, pw, pb, fw, fb)


# ----------------------------- model definition -----------------------------

CFG = dict(
    vocab_size=64,      # small synthetic vocab (real PubMedBERT: 30522)
    hidden=32,          # real: 768
    num_layers=2,       # real: 12
    num_heads=4,        # real: 12
    intermediate=64,    # real: 3072
    max_position=16,    # real: 512
    type_vocab=2,
    layer_norm_eps=1e-12,
    num_labels=2,
)


def _fuse_qkv_grouped(wq, wk, wv, bq, bk, bv, nH, dH, gH):
    """Fuse separate Q/K/V projection weights into one (H, 3H) matrix whose output
    columns are grouped per head-group: [q_g | k_g | v_g] for g = 0..nG-1.  A real
    HF checkpoint would be permuted the same way once, offline."""
    nG = nH // gH
    gW = gH * dH
    H_in = wq.shape[0]

    def split_w(w):
        w = w.reshape(H_in, nG, gW)
        return [w[:, g, :] for g in range(nG)]

    def split_b(b):
        b = b.reshape(1, nG, gW)
        return [b[:, g, :] for g in range(nG)]

    qg, kg, vg = split_w(wq), split_w(wk), split_w(wv)
    bqg, bkg, bvg = split_b(bq), split_b(bk), split_b(bv)
    w_cols, b_cols = [], []
    for g in range(nG):
        w_cols += [qg[g], kg[g], vg[g]]
        b_cols += [bqg[g], bkg[g], bvg[g]]
    return jnp.concatenate(w_cols, axis=1), jnp.concatenate(b_cols, axis=1)


def init_params(key, cfg):
    H, I = cfg["hidden"], cfg["intermediate"]
    nH = cfg["num_heads"]
    dH = H // nH
    gH = _heads_per_group(nH, dH)

    def nxt():
        nonlocal key
        key, sub = jax.random.split(key)
        return sub

    def dense(din, dout):
        w = (0.02 * jax.random.normal(nxt(), (din, dout), jnp.float32)).astype(jnp.bfloat16)
        b = jnp.zeros((1, dout), jnp.float32)
        return w, b

    params = dict(
        word_emb=0.02 * jax.random.normal(nxt(), (cfg["vocab_size"], H), jnp.float32),
        pos_emb=0.02 * jax.random.normal(nxt(), (cfg["max_position"], H), jnp.float32),
        type_emb=0.02 * jax.random.normal(nxt(), (cfg["type_vocab"], H), jnp.float32),
        emb_ln_g=jnp.ones((1, H), jnp.float32),
        emb_ln_b=jnp.zeros((1, H), jnp.float32),
        layers=[],
    )
    for _ in range(cfg["num_layers"]):
        wq, bq = dense(H, H)
        wk, bk = dense(H, H)
        wv, bv = dense(H, H)
        qkv_w, qkv_b = _fuse_qkv_grouped(wq, wk, wv, bq, bk, bv, nH, dH, gH)
        ow, ob = dense(H, H)
        iw, ib = dense(H, I)
        fw, fb = dense(I, H)
        params["layers"].append(dict(
            qkv_w=qkv_w, qkv_b=qkv_b, o_w=ow, o_b=ob,
            attn_ln_g=jnp.ones((1, H), jnp.float32),
            attn_ln_b=jnp.zeros((1, H), jnp.float32),
            i_w=iw, i_b=ib, f_w=fw, f_b=fb,
            ffn_ln_g=jnp.ones((1, H), jnp.float32),
            ffn_ln_b=jnp.zeros((1, H), jnp.float32),
        ))
    params["pooler_w"], params["pooler_b"] = dense(H, H)
    params["fc_w"], params["fc_b"] = dense(H, cfg["num_labels"])
    return params


def bert_layer(x, p, mask_bias, B, S, nH, dH):
    """x: (B*S, H) bf16 -> (B*S, H) bf16. Standard post-LN BERT encoder layer."""
    H = nH * dH
    qkv = linear(x, p["qkv_w"], p["qkv_b"])                         # (B*S, 3H), head-grouped cols
    ctx = attention(qkv.reshape(B, S, 3 * H), mask_bias, nH, dH)    # (B, S, H)
    x = linear_add_layernorm(ctx.reshape(B * S, H), p["o_w"], p["o_b"],
                             x, p["attn_ln_g"], p["attn_ln_b"])
    inter = linear(x, p["i_w"], p["i_b"], activation="gelu")        # (B*S, I)
    x = linear_add_layernorm(inter, p["f_w"], p["f_b"],
                             x, p["ffn_ln_g"], p["ffn_ln_b"])
    return x


def pubmedbert_forward(params, input_ids, token_type_ids, attention_mask, cfg):
    B, S = input_ids.shape
    H = cfg["hidden"]
    nH = cfg["num_heads"]
    dH = H // nH

    # --- embeddings (table gathers are XLA glue; LayerNorm is a Pallas kernel) ---
    pos_ids = jnp.arange(S, dtype=jnp.int32)
    emb = (params["word_emb"][input_ids]
           + params["pos_emb"][pos_ids][None, :, :]
           + params["type_emb"][token_type_ids])                    # f32 (B,S,H)
    x = layernorm(emb.reshape(B * S, H).astype(jnp.bfloat16),        # bf16 stream to LN
                  params["emb_ln_g"], params["emb_ln_b"])
    # embedding dropout (p=0.1) -> identity in eval

    # --- extended attention mask: (1 - mask) * -10000, kept as (B, 1, S) ---
    mask_bias = ((1.0 - attention_mask.astype(jnp.float32)) * -10000.0)[:, None, :]

    # --- encoder stack ---
    for layer_params in params["layers"]:
        x = bert_layer(x, layer_params, mask_bias, B, S, nH, dH)

    last_hidden = x.reshape(B, S, H)

    # --- pooler (tanh) + Dropout(0.1)->identity + Linear(768 -> 2), fused ---
    cls = last_hidden[:, 0, :]
    logits = pooler_classifier(cls, params["pooler_w"], params["pooler_b"],
                               params["fc_w"], params["fc_b"])

    # Mirrors SequenceClassifierOutput(loss=None, logits=..., hidden_states=None, attentions=None)
    return dict(loss=None, logits=logits, hidden_states=None, attentions=None)


# ----------------------------- demo -----------------------------

if __name__ == "__main__":
    key = jax.random.PRNGKey(0)
    pkey, ikey, tkey = jax.random.split(key, 3)

    params = init_params(pkey, CFG)

    B, S = 2, 8
    input_ids = jax.random.randint(ikey, (B, S), 0, CFG["vocab_size"], dtype=jnp.int32)
    token_type_ids = jax.random.randint(tkey, (B, S), 0, CFG["type_vocab"], dtype=jnp.int32)
    attention_mask = jnp.array([[1] * S, [1] * (S - 2) + [0] * 2], dtype=jnp.int32)

    out = pubmedbert_forward(params, input_ids, token_type_ids, attention_mask, CFG)
    jax.block_until_ready(out["logits"])
    assert out["logits"].shape == (B, CFG["num_labels"])
    print("KERNEL_OK")
</pallas_src>

<mosaic_0001>
module attributes {stable_mosaic.version = 11 : i64} {
  func.func @_layernorm_kernel(%arg0: i32, %arg1: memref<16x32xbf16, #tpu.memory_space<vmem>>, %arg2: memref<1x32xf32, #tpu.memory_space<vmem>>, %arg3: memref<1x32xf32, #tpu.memory_space<vmem>>, %arg4: memref<16x32xbf16, #tpu.memory_space<vmem>>) attributes {dimension_semantics = [#tpu.dimension_semantics<parallel>], iteration_bounds = array<i64: 1>, scalar_prefetch = 0 : i64, scratch_operands = 0 : i64, tpu.core_type = #tpu.core_type<tc>, window_params = [{transform_indices = @transform_0, window_bounds = array<i64: 16, 32>}, {pipeline_mode = #tpu.pipeline_mode<synchronous>, transform_indices = @transform_1, window_bounds = array<i64: 1, 32>}, {pipeline_mode = #tpu.pipeline_mode<synchronous>, transform_indices = @transform_2, window_bounds = array<i64: 1, 32>}, {transform_indices = @transform_3, window_bounds = array<i64: 16, 32>}]} {
    %c0 = arith.constant 0 : index
    %c0_0 = arith.constant 0 : index
    %0 = vector.load %arg1[%c0, %c0_0] : memref<16x32xbf16, #tpu.memory_space<vmem>>, vector<16x32xbf16>
    %1 = arith.extf %0 : vector<16x32xbf16> to vector<16x32xf32>
    %cst = arith.constant dense<0.000000e+00> : vector<16xf32>
    %2 = vector.multi_reduction <add>, %1, %cst [1] : vector<16x32xf32> to vector<16xf32>
    %3 = vector.shape_cast %2 : vector<16xf32> to vector<16x1xf32>
    %cst_1 = arith.constant 3.200000e+01 : f32
    %4 = vector.broadcast %cst_1 : f32 to vector<16x1xf32>
    %5 = arith.divf %3, %4 : vector<16x1xf32>
    %6 = vector.broadcast %5 : vector<16x1xf32> to vector<16x32xf32>
    %7 = arith.subf %1, %6 : vector<16x32xf32>
    %8 = arith.mulf %7, %7 : vector<16x32xf32>
    %cst_2 = arith.constant dense<0.000000e+00> : vector<16xf32>
    %9 = vector.multi_reduction <add>, %8, %cst_2 [1] : vector<16x32xf32> to vector<16xf32>
    %10 = vector.shape_cast %9 : vector<16xf32> to vector<16x1xf32>
    %cst_3 = arith.constant 3.200000e+01 : f32
    %11 = vector.broadcast %cst_3 : f32 to vector<16x1xf32>
    %12 = arith.divf %10, %11 : vector<16x1xf32>
    %13 = vector.broadcast %5 : vector<16x1xf32> to vector<16x32xf32>
    %14 = arith.subf %1, %13 : vector<16x32xf32>
    %cst_4 = arith.constant 9.99999996E-13 : f32
    %15 = vector.broadcast %cst_4 : f32 to vector<16x1xf32>
    %16 = arith.addf %12, %15 : vector<16x1xf32>
    %17 = math.rsqrt %16 : vector<16x1xf32>
    %18 = vector.broadcast %17 : vector<16x1xf32> to vector<16x32xf32>
    %19 = arith.mulf %14, %18 : vector<16x32xf32>
    %c0_5 = arith.constant 0 : index
    %c0_6 = arith.constant 0 : index
    %20 = vector.load %arg2[%c0_5, %c0_6] : memref<1x32xf32, #tpu.memory_space<vmem>>, vector<1x32xf32>
    %21 = vector.broadcast %20 : vector<1x32xf32> to vector<16x32xf32>
    %22 = arith.mulf %19, %21 : vector<16x32xf32>
    %c0_7 = arith.constant 0 : index
    %c0_8 = arith.constant 0 : index
    %23 = vector.load %arg3[%c0_7, %c0_8] : memref<1x32xf32, #tpu.memory_space<vmem>>, vector<1x32xf32>
    %24 = vector.broadcast %23 : vector<1x32xf32> to vector<16x32xf32>
    %25 = arith.addf %22, %24 : vector<16x32xf32>
    %26 = arith.truncf %25 : vector<16x32xf32> to vector<16x32xbf16>
    %c0_9 = arith.constant 0 : index
    %c0_10 = arith.constant 0 : index
    %27 = vector.load %arg4[%c0_9, %c0_10] : memref<16x32xbf16, #tpu.memory_space<vmem>>, vector<16x32xbf16>
    tpu.vector_store %arg4[%c0_9, %c0_10], %26 {strides = array<i32>} : memref<16x32xbf16, #tpu.memory_space<vmem>>, vector<16x32xbf16>,
    return
  }
  func.func @transform_0(%arg0: i32) -> (i32, i32) {
    %c0_i32 = arith.constant 0 : i32
    %c0_i32_0 = arith.constant 0 : i32
    return %arg0, %c0_i32 : i32, i32
  }
  func.func @transform_1(%arg0: i32) -> (i32, i32) {
    %c0_i32 = arith.constant 0 : i32
    %c0_i32_0 = arith.constant 0 : i32
    %c0_i32_1 = arith.constant 0 : i32
    return %c0_i32, %c0_i32_0 : i32, i32
  }
  func.func @transform_2(%arg0: i32) -> (i32, i32) {
    %c0_i32 = arith.constant 0 : i32
    %c0_i32_0 = arith.constant 0 : i32
    %c0_i32_1 = arith.constant 0 : i32
    return %c0_i32, %c0_i32_0 : i32, i32
  }
  func.func @transform_3(%arg0: i32) -> (i32, i32) {
    %c0_i32 = arith.constant 0 : i32
    %c0_i32_0 = arith.constant 0 : i32
    return %arg0, %c0_i32 : i32, i32
  }
}

</mosaic_0001>

<llo_original>
// kernel: tpu_custom_call.1
$region0: #{tpu_custom_call.1}
  #allocation0 [shape = 'u32[]', space=smem, size = 0x4, offset = 0x4, fixed_abs, tag = 'smem constant byte address 0x4 - core index']
  #allocation1 [shape = 'u32[144,128]{1,0:T(1,128)}', space=vmem, size = 0x12000, scoped, tag = 'internal scratch']
  %s0 = inlined_call_operand.hbm [shape: bf16[16,32], index: 0, kind: input, shape index: {}]
  %s1 = inlined_call_operand.vmem [shape: f32[1,32], index: 1, kind: input, shape index: {}]
  %s2 = inlined_call_operand.vmem [shape: f32[1,32], index: 2, kind: input, shape index: {}]
  %s3 = inlined_call_operand.hbm [shape: bf16[16,32], index: 3, kind: output, shape index: {}]
  %s4 = sld [smem:[#allocation0]]
  $region26: #{tpu_custom_call.1} parent=0
    _
  %s6 = ssub.s32 1, %s4
  %s7 = scalar_select 0, %s6, %s4
  $region1: #{tpu_custom_call.1} parent=0
    #allocation2 [shape = 'u8[4096]{0}', space=vmem, size = 0x1000, scoped, tag = 'input window, operand 0, single buffered']
    #allocation3 [shape = 's32[1]{0}', space=sflag, size = 0x4, scoped, tag = 'scoped memory for tpu_custom_call.1']
    #allocation4 [shape = 's32[1]{0}', space=sflag, size = 0x4, scoped, tag = 'scoped memory for tpu_custom_call.1']
    #allocation5 [shape = 'u8[4096]{0}', space=vmem, size = 0x1000, scoped, tag = 'output window, operand 0, single buffered']
    %8 = vsyncpa [#allocation3], 0
    %9 = vsyncpa [#allocation4], 0
    // Predicated region
    $region2: #{tpu_custom_call.1} parent=1 // pred_check
      _
    $region3: #{tpu_custom_call.1} parent=1 // pred_check_branch
      %11 = sbr.rel (0) target = $region5
    $region4: #{tpu_custom_call.1} parent=1 // pred_region
      %s13 = ssub.s32 128, 128
      %14 = vsyncadd [#allocation3], %s13
      %s15 = sshll.u32 [#allocation2], 4
      %s16 = int_to_ptr.vmem [resolvable:$true] %s15
      %21 = dma.hbm_to_vmem [thread:$0]  %s0, 128, %s16, [#allocation3], 64, 64, 4
    $region5: #{tpu_custom_call.1} parent=1 // pred_fallthru
      _
    // Predicated region
    $region6: #{tpu_custom_call.1} parent=1 // pred_check
      _
    $region7: #{tpu_custom_call.1} parent=1 // pred_check_branch
      %23 = sbr.rel (0) target = $region9
    $region8: #{tpu_custom_call.1} parent=1 // pred_region
      _
    $region9: #{tpu_custom_call.1} parent=1 // pred_fallthru
      _
    // Predicated region
    $region10: #{tpu_custom_call.1} parent=1 // pred_check
      _
    $region11: #{tpu_custom_call.1} parent=1 // pred_check_branch
      %25 = sbr.rel (0) target = $region13
    $region12: #{tpu_custom_call.1} parent=1 // pred_region
      _
    $region13: #{tpu_custom_call.1} parent=1 // pred_fallthru
      _
    // Predicated region
    $region14: #{tpu_custom_call.1} parent=1 // pred_check
      _
    $region15: #{tpu_custom_call.1} parent=1 // pred_check_branch
      %27 = sbr.rel (0) target = $region17
    $region16: #{tpu_custom_call.1} parent=1 // pred_region
      %28 = dma.done [#allocation3], 128
    $region17: #{tpu_custom_call.1} parent=1 // pred_fallthru
      _
    %v29 = vld [vmem:[#allocation2] sm:$0xf]
    %v30 = vld [vmem:[#allocation2 + $0x4] sm:$0xf]
    %v31 = vunpack.c.l.bf16 %v29
    %v32 = vunpack.c.l.bf16 %v30
    %vm33 = vcmask 261120
    %v34 = vsel %vm33, %v31, 0.0
    %35 = vadd.xlane.f32.xlu0 %v34
    %v36 = vpop.xlane.xlu0 %35
    %v37 = vsel %vm33, %v32, 0.0
    %38 = vadd.xlane.f32.xlu0 %v37
    %v39 = vpop.xlane.xlu0 %38
    %v40 = vrcp.pop 32.0
    %v41 = vmul.f32 %v36, %v40
    %v42 = vmul.f32 %v39, %v40
    %v43 = vsub.f32 %v31, %v41
    %v44 = vsub.f32 %v32, %v42
    %v45 = vmul.f32 %v43, %v43
    %v46 = vmul.f32 %v44, %v44
    %v47 = vsel %vm33, %v45, 0.0
    %48 = vadd.xlane.f32.xlu0 %v47
    %v49 = vpop.xlane.xlu0 %48
    %v50 = vsel %vm33, %v46, 0.0
    %51 = vadd.xlane.f32.xlu0 %v50
    %v52 = vpop.xlane.xlu0 %51
    %v53 = vmul.f32 %v49, %v40
    %v54 = vmul.f32 %v52, %v40
    %v55 = vadd.f32 %v53, 1e-12
    %v56 = vadd.f32 %v54, 1e-12
    %v57 = vrsqrt.pop %v55
    %v58 = vrsqrt.pop %v56
    %v59 = vmul.f32 %v43, %v57
    %v60 = vmul.f32 %v44, %v58
    %v61 = vld [vmem:[%s1] sm:$0x1]
    %v63 = vlaneseq
    %v64 = vshrl.u32 %v63, 7
    %v65 = vsub.s32 0, %v64
    %v66 = vrot.slane %v61, %v65
    %v68 = vmul.f32 %v59, %v66
    %v69 = vmul.f32 %v60, %v66
    %v70 = vld [vmem:[%s2] sm:$0x1]
    %v72 = vlaneseq
    %v73 = vshrl.u32 %v72, 7
    %v74 = vsub.s32 0, %v73
    %v75 = vrot.slane %v70, %v74
    %v77 = vadd.f32 %v68, %v75
    %v78 = vadd.f32 %v69, %v75
    %v79 = vpack.c.bf16 %v78, %v77
    %v81 = vunpack.c.l.b16 %v79
    %v82 = vunpack.c.h.b16 %v79
    %v83 = vpack.c.b16 %v81, %v81
    %v84 = vpack.c.b16 %v82, %v82
    %vm87 = vcmask 257024
    %88 = vst.msk [vmem:[#allocation5] sm:$0xf] %vm87, %v83
    %89 = vst.msk [vmem:[#allocation5 + $0x4] sm:$0xf] %vm87, %v84
    // Predicated region
    $region18: #{tpu_custom_call.1} parent=1 // pred_check
      _
    $region19: #{tpu_custom_call.1} parent=1 // pred_check_branch
      %91 = sbr.rel (0) target = $region21
    $region20: #{tpu_custom_call.1} parent=1 // pred_region
      %s93 = ssub.s32 128, 128
      %94 = vsyncadd [#allocation4], %s93
      %s95 = sshll.u32 [#allocation5], 4
      %s96 = int_to_ptr.vmem [resolvable:$true] %s95
      %101 = dma.vmem_to_hbm [thread:$0]  %s96, 128, %s3, [#allocation4], 64, 64, 4
    $region21: #{tpu_custom_call.1} parent=1 // pred_fallthru
      _
    // Predicated region
    $region22: #{tpu_custom_call.1} parent=1 // pred_check
      _
    $region23: #{tpu_custom_call.1} parent=1 // pred_check_branch
      %103 = sbr.rel (0) target = $region25
    $region24: #{tpu_custom_call.1} parent=1 // pred_region
      %104 = dma.done [#allocation4], 128
    $region25: #{tpu_custom_call.1} parent=1 // pred_fallthru
      _
    %105 = vsyncpa [#allocation3], 1
    %106 = vsyncpa [#allocation4], 1

</llo_original>
